<compile_context>
chip_gen: v5e
topology: v5e:2x2
jax: 0.10.0
libtpu: 0.0.40
codegen_flags: <defaults>
</compile_context>

<pallas_src>
import jax
import jax.numpy as jnp
from jax.experimental import pallas as pl
from jax.experimental.pallas import tpu as pltpu


def _round_up(v: int, m: int) -> int:
    return ((v + m - 1) // m) * m


def _onehot_mlp_kernel(x_ref, w1_ref, b1_ref, w2_ref, b2_ref, o_ref):
    # Cast x tile to bf16 in-kernel (VPU work hidden under DMA/MXU); the f32
    # read from HBM is the unpadded original — no wrapper-side copy.
    x_bf16 = x_ref[...].astype(jnp.bfloat16)
    # fc1: [TM, C_in](bf16) @ [C_in, H](bf16) -> f32 accumulate on the MXU.
    h = jnp.dot(x_bf16, w1_ref[...], preferred_element_type=jnp.float32)
    # bias + ReLU in f32 (VPU); b1 is [1, H] and broadcasts over rows.
    h = jnp.maximum(h + b1_ref[...], 0.0)
    # fc2: cast activations to bf16 only as MXU input; accumulate in f32.
    out = jnp.dot(h.astype(w2_ref.dtype), w2_ref[...],
                  preferred_element_type=jnp.float32)
    o_ref[...] = (out + b2_ref[...]).astype(o_ref.dtype)


def onehot_mlp(x, w1, b1, w2, b2, *, tm: int = 2048, out_dtype=jnp.float32):
    """Fused MLP forward.

    x : [N, C_in] float32
    w1: [C_in, H]   (transpose of torch fc1.weight)
    b1: [H]
    w2: [H, C_out]  (transpose of torch fc2.weight)
    b2: [C_out]
    returns [1, N, C_out] in out_dtype (default float32, matching torch).
    """
    n, c_in = x.shape
    h = w1.shape[1]
    c_out = w2.shape[1]

    # Row tile: cap at `tm`, keep the 8-sublane granule. No padding of N —
    # the last (partial) tile's writes are masked by Pallas.
    tm_eff = min(tm, _round_up(n, 8))
    # v7x megacore: make sure a non-trivial N produces at least 2 independent
    # row tiles so the ("parallel",) axis can be sharded across both cores.
    if n >= 128:
        tm_eff = min(tm_eff, _round_up(pl.cdiv(n, 2), 8))
    grid = (pl.cdiv(n, tm_eff),)

    # Weights as bf16 (native MXU rate); one-time tiny casts in the wrapper.
    w1_b = w1.astype(jnp.bfloat16)
    w2_b = w2.astype(jnp.bfloat16)
    # Biases stay f32 for the epilogue.
    b1_2d = b1.reshape(1, h).astype(jnp.float32)
    b2_2d = b2.reshape(1, c_out).astype(jnp.float32)

    out_itemsize = jnp.dtype(out_dtype).itemsize
    cost = pl.CostEstimate(
        flops=2 * n * (c_in * h + h * c_out),
        transcendentals=0,
        bytes_accessed=(x.size * x.dtype.itemsize
                        + w1_b.size * 2 + w2_b.size * 2
                        + b1_2d.size * 4 + b2_2d.size * 4
                        + n * c_out * out_itemsize),
    )

    out = pl.pallas_call(
        _onehot_mlp_kernel,
        out_shape=jax.ShapeDtypeStruct((n, c_out), out_dtype),
        grid_spec=pl.GridSpec(
            grid=grid,
            in_specs=[
                # x: streamed per row-tile (double-buffered by Pallas);
                # last dim = full array dim (40) is legal, padded internally.
                pl.BlockSpec((tm_eff, c_in), lambda i: (i, 0)),
                # weights / biases: same block every step -> VMEM resident.
                pl.BlockSpec((c_in, h), lambda i: (0, 0)),
                pl.BlockSpec((1, h), lambda i: (0, 0)),
                pl.BlockSpec((h, c_out), lambda i: (0, 0)),
                pl.BlockSpec((1, c_out), lambda i: (0, 0)),
            ],
            out_specs=pl.BlockSpec((tm_eff, c_out), lambda i: (i, 0)),
        ),
        compiler_params=pltpu.CompilerParams(
            # Row tiles are independent -> megacore-shardable on v7x.
            dimension_semantics=("parallel",)),
        cost_estimate=cost,
    )(x, w1_b, b1_2d, w2_b, b2_2d)

    # Match torch's `x[None, :, :]`; no slicing — out_shape is already exact.
    return out[None, :, :]


def _reference(x, w1, b1, w2, b2):
    hidden = jnp.maximum(x @ w1 + b1, 0.0)
    return (hidden @ w2 + b2)[None, :, :]


if __name__ == "__main__":
    # Module defaults: in_channel=40, hidden_dim=128, out_dim=256.
    in_channel, hidden_dim, out_dim = 40, 128, 256
    n_points = 16  # small number of input rows

    key = jax.random.PRNGKey(0)
    kx, k1, kb1, k2, kb2 = jax.random.split(key, 5)

    x = jax.random.normal(kx, (n_points, in_channel), dtype=jnp.float32)

    # Deterministic parameter init (synthetic; shapes follow nn.Linear).
    # Stored pre-transposed: w1 = fc1.weight.T, w2 = fc2.weight.T
    w1 = jax.random.normal(k1, (in_channel, hidden_dim), dtype=jnp.float32) * 0.1
    b1 = jax.random.normal(kb1, (hidden_dim,), dtype=jnp.float32) * 0.1
    w2 = jax.random.normal(k2, (hidden_dim, out_dim), dtype=jnp.float32) * 0.1
    b2 = jax.random.normal(kb2, (out_dim,), dtype=jnp.float32) * 0.1

    out = onehot_mlp(x, w1, b1, w2, b2)
    out = jax.block_until_ready(out)

    ref = _reference(x, w1, b1, w2, b2)
    assert out.shape == (1, n_points, out_dim), out.shape
    # bf16 matmul operands with f32 accumulation -> ~1e-3 relative error.
    assert jnp.allclose(out, ref, atol=5e-2, rtol=5e-2), "mismatch vs reference"

    print("KERNEL_OK")
</pallas_src>

<mosaic_0001>
module attributes {stable_mosaic.version = 11 : i64} {
  func.func @_onehot_mlp_kernel(%arg0: i32, %arg1: memref<16x40xf32, #tpu.memory_space<vmem>>, %arg2: memref<40x128xbf16, #tpu.memory_space<vmem>>, %arg3: memref<1x128xf32, #tpu.memory_space<vmem>>, %arg4: memref<128x256xbf16, #tpu.memory_space<vmem>>, %arg5: memref<1x256xf32, #tpu.memory_space<vmem>>, %arg6: memref<16x256xf32, #tpu.memory_space<vmem>>) attributes {dimension_semantics = [#tpu.dimension_semantics<parallel>], iteration_bounds = array<i64: 1>, scalar_prefetch = 0 : i64, scratch_operands = 0 : i64, tpu.core_type = #tpu.core_type<tc>, window_params = [{transform_indices = @transform_0, window_bounds = array<i64: 16, 40>}, {pipeline_mode = #tpu.pipeline_mode<synchronous>, transform_indices = @transform_1, window_bounds = array<i64: 40, 128>}, {pipeline_mode = #tpu.pipeline_mode<synchronous>, transform_indices = @transform_2, window_bounds = array<i64: 1, 128>}, {pipeline_mode = #tpu.pipeline_mode<synchronous>, transform_indices = @transform_3, window_bounds = array<i64: 128, 256>}, {pipeline_mode = #tpu.pipeline_mode<synchronous>, transform_indices = @transform_4, window_bounds = array<i64: 1, 256>}, {transform_indices = @transform_5, window_bounds = array<i64: 16, 256>}]} {
    %c0 = arith.constant 0 : index
    %c0_0 = arith.constant 0 : index
    %0 = vector.load %arg1[%c0, %c0_0] : memref<16x40xf32, #tpu.memory_space<vmem>>, vector<16x40xf32>
    %1 = arith.truncf %0 : vector<16x40xf32> to vector<16x40xbf16>
    %c0_1 = arith.constant 0 : index
    %c0_2 = arith.constant 0 : index
    %2 = vector.load %arg2[%c0_1, %c0_2] : memref<40x128xbf16, #tpu.memory_space<vmem>>, vector<40x128xbf16>
    %cst = arith.constant dense<0.000000e+00> : vector<16x128xf32>
    %3 = tpu.matmul %1, %2, %cst {dimension_numbers = #tpu.dot_dimension_numbers<[1], [0], [0], [1], [0, 0, 1, 1], [], []>} : vector<16x40xbf16>, vector<40x128xbf16>, vector<16x128xf32> -> vector<16x128xf32>
    %c0_3 = arith.constant 0 : index
    %c0_4 = arith.constant 0 : index
    %4 = vector.load %arg3[%c0_3, %c0_4] : memref<1x128xf32, #tpu.memory_space<vmem>>, vector<1x128xf32>
    %5 = vector.broadcast %4 : vector<1x128xf32> to vector<16x128xf32>
    %6 = arith.addf %3, %5 : vector<16x128xf32>
    %cst_5 = arith.constant 0.000000e+00 : f32
    %7 = vector.broadcast %cst_5 : f32 to vector<16x128xf32>
    %8 = arith.maximumf %6, %7 : vector<16x128xf32>
    %9 = arith.truncf %8 : vector<16x128xf32> to vector<16x128xbf16>
    %c0_6 = arith.constant 0 : index
    %c0_7 = arith.constant 0 : index
    %10 = vector.load %arg4[%c0_6, %c0_7] : memref<128x256xbf16, #tpu.memory_space<vmem>>, vector<128x256xbf16>
    %cst_8 = arith.constant dense<0.000000e+00> : vector<16x256xf32>
    %11 = tpu.matmul %9, %10, %cst_8 {dimension_numbers = #tpu.dot_dimension_numbers<[1], [0], [0], [1], [0, 0, 1, 1], [], []>} : vector<16x128xbf16>, vector<128x256xbf16>, vector<16x256xf32> -> vector<16x256xf32>
    %c0_9 = arith.constant 0 : index
    %c0_10 = arith.constant 0 : index
    %12 = vector.load %arg5[%c0_9, %c0_10] : memref<1x256xf32, #tpu.memory_space<vmem>>, vector<1x256xf32>
    %13 = vector.broadcast %12 : vector<1x256xf32> to vector<16x256xf32>
    %14 = arith.addf %11, %13 : vector<16x256xf32>
    %c0_11 = arith.constant 0 : index
    %c0_12 = arith.constant 0 : index
    %15 = vector.load %arg6[%c0_11, %c0_12] : memref<16x256xf32, #tpu.memory_space<vmem>>, vector<16x256xf32>
    tpu.vector_store %arg6[%c0_11, %c0_12], %14 {strides = array<i32>} : memref<16x256xf32, #tpu.memory_space<vmem>>, vector<16x256xf32>,
    return
  }
  func.func @transform_0(%arg0: i32) -> (i32, i32) {
    %c0_i32 = arith.constant 0 : i32
    %c0_i32_0 = arith.constant 0 : i32
    return %arg0, %c0_i32 : i32, i32
  }
  func.func @transform_1(%arg0: i32) -> (i32, i32) {
    %c0_i32 = arith.constant 0 : i32
    %c0_i32_0 = arith.constant 0 : i32
    %c0_i32_1 = arith.constant 0 : i32
    return %c0_i32, %c0_i32_0 : i32, i32
  }
  func.func @transform_2(%arg0: i32) -> (i32, i32) {
    %c0_i32 = arith.constant 0 : i32
    %c0_i32_0 = arith.constant 0 : i32
    %c0_i32_1 = arith.constant 0 : i32
    return %c0_i32, %c0_i32_0 : i32, i32
  }
  func.func @transform_3(%arg0: i32) -> (i32, i32) {
    %c0_i32 = arith.constant 0 : i32
    %c0_i32_0 = arith.constant 0 : i32
    %c0_i32_1 = arith.constant 0 : i32
    return %c0_i32, %c0_i32_0 : i32, i32
  }
  func.func @transform_4(%arg0: i32) -> (i32, i32) {
    %c0_i32 = arith.constant 0 : i32
    %c0_i32_0 = arith.constant 0 : i32
    %c0_i32_1 = arith.constant 0 : i32
    return %c0_i32, %c0_i32_0 : i32, i32
  }
  func.func @transform_5(%arg0: i32) -> (i32, i32) {
    %c0_i32 = arith.constant 0 : i32
    %c0_i32_0 = arith.constant 0 : i32
    return %arg0, %c0_i32 : i32, i32
  }
}

</mosaic_0001>

<llo_original>
// kernel: tpu_custom_call.1
$region0: #{tpu_custom_call.1}
  #allocation0 [shape = 'u32[]', space=smem, size = 0x4, offset = 0x4, fixed_abs, tag = 'smem constant byte address 0x4 - core index']
  #allocation1 [shape = 'u32[72,128]{1,0:T(1,128)}', space=vmem, size = 0x9000, scoped, tag = 'internal scratch']
  %s0 = inlined_call_operand.hbm [shape: f32[16,40], index: 0, kind: input, shape index: {}]
  %s1 = inlined_call_operand.hbm [shape: bf16[40,128], index: 1, kind: input, shape index: {}]
  %s2 = inlined_call_operand.vmem [shape: f32[1,128], index: 2, kind: input, shape index: {}]
  %s3 = inlined_call_operand.hbm [shape: bf16[128,256], index: 3, kind: input, shape index: {}]
  %s4 = inlined_call_operand.vmem [shape: f32[1,256], index: 4, kind: input, shape index: {}]
  %s5 = inlined_call_operand.hbm [shape: f32[16,256], index: 5, kind: output, shape index: {}]
  %s6 = sld [smem:[#allocation0]]
  $region42: #{tpu_custom_call.1} parent=0
    _
  %s8 = ssub.s32 1, %s6
  %s9 = scalar_select 0, %s8, %s6
  $region1: #{tpu_custom_call.1} parent=0
    #allocation2 [shape = 'u8[8192]{0}', space=vmem, size = 0x2000, scoped, tag = 'input window, operand 0, single buffered']
    #allocation3 [shape = 's32[1]{0}', space=sflag, size = 0x4, scoped, tag = 'scoped memory for tpu_custom_call.1']
    #allocation4 [shape = 's32[1]{0}', space=sflag, size = 0x4, scoped, tag = 'scoped memory for tpu_custom_call.1']
    #allocation5 [shape = 'u8[10240]{0}', space=vmem, size = 0x2800, scoped, tag = 'input window, operand 1, single buffered']
    #allocation6 [shape = 's32[1]{0}', space=sflag, size = 0x4, scoped, tag = 'scoped memory for tpu_custom_call.1']
    #allocation7 [shape = 'u8[65536]{0}', space=vmem, size = 0x10000, scoped, tag = 'input window, operand 3, single buffered']
    #allocation8 [shape = 'u8[16384]{0}', space=vmem, size = 0x4000, scoped, tag = 'output window, operand 0, single buffered']
    %10 = vsyncpa [#allocation3], 0
    %11 = vsyncpa [#allocation6], 0
    %12 = vsyncpa [#allocation4], 0
    // Predicated region
    $region2: #{tpu_custom_call.1} parent=1 // pred_check
      _
    $region3: #{tpu_custom_call.1} parent=1 // pred_check_branch
      %14 = sbr.rel (0) target = $region5
    $region4: #{tpu_custom_call.1} parent=1 // pred_region
      %16 = vsyncadd [#allocation3], 0
      %s17 = sshll.u32 %s0, 4
      %s18 = int_to_ptr.hbm [resolvable:$true] %s17
      %s19 = sshll.u32 [#allocation2], 4
      %s20 = int_to_ptr.vmem [resolvable:$true] %s19
      %25 = dma.hbm_to_vmem [thread:$0]  %s18, 256, %s20, [#allocation3], 128, 128, 8
    $region5: #{tpu_custom_call.1} parent=1 // pred_fallthru
      _
    // Predicated region
    $region6: #{tpu_custom_call.1} parent=1 // pred_check
      _
    $region7: #{tpu_custom_call.1} parent=1 // pred_check_branch
      %27 = sbr.rel (0) target = $region9
    $region8: #{tpu_custom_call.1} parent=1 // pred_region
      %29 = vsyncadd [#allocation6], 0
      %s30 = sshll.u32 %s1, 4
      %s31 = int_to_ptr.hbm [resolvable:$true] %s30
      %s32 = sshll.u32 [#allocation5], 4
      %s33 = int_to_ptr.vmem [resolvable:$true] %s32
      %38 = dma.hbm_to_vmem [thread:$0]  %s31, 320, %s33, [#allocation6], 64, 64, 4
    $region9: #{tpu_custom_call.1} parent=1 // pred_fallthru
      _
    // Predicated region
    $region10: #{tpu_custom_call.1} parent=1 // pred_check
      _
    $region11: #{tpu_custom_call.1} parent=1 // pred_check_branch
      %40 = sbr.rel (0) target = $region13
    $region12: #{tpu_custom_call.1} parent=1 // pred_region
      _
    $region13: #{tpu_custom_call.1} parent=1 // pred_fallthru
      _
    // Predicated region
    $region14: #{tpu_custom_call.1} parent=1 // pred_check
      _
    $region15: #{tpu_custom_call.1} parent=1 // pred_check_branch
      %42 = sbr.rel (0) target = $region17
    $region16: #{tpu_custom_call.1} parent=1 // pred_region
      %44 = vsyncadd [#allocation6], 0
      %s45 = sshll.u32 %s3, 4
      %s46 = int_to_ptr.hbm [resolvable:$true] %s45
      %s47 = sshll.u32 [#allocation7], 4
      %s48 = int_to_ptr.vmem [resolvable:$true] %s47
      %53 = dma.hbm_to_vmem [thread:$0]  %s46, 2048, %s48, [#allocation6], 128, 128, 8
    $region17: #{tpu_custom_call.1} parent=1 // pred_fallthru
      _
    // Predicated region
    $region18: #{tpu_custom_call.1} parent=1 // pred_check
      _
    $region19: #{tpu_custom_call.1} parent=1 // pred_check_branch
      %55 = sbr.rel (0) target = $region21
    $region20: #{tpu_custom_call.1} parent=1 // pred_region
      _
    $region21: #{tpu_custom_call.1} parent=1 // pred_fallthru
      _
    // Predicated region
    $region22: #{tpu_custom_call.1} parent=1 // pred_check
      _
    $region23: #{tpu_custom_call.1} parent=1 // pred_check_branch
      %57 = sbr.rel (0) target = $region25
    $region24: #{tpu_custom_call.1} parent=1 // pred_region
      %59 = dma.done [#allocation3], 256
    $region25: #{tpu_custom_call.1} parent=1 // pred_fallthru
      _
    // Predicated region
    $region26: #{tpu_custom_call.1} parent=1 // pred_check
      _
    $region27: #{tpu_custom_call.1} parent=1 // pred_check_branch
      %61 = sbr.rel (0) target = $region29
    $region28: #{tpu_custom_call.1} parent=1 // pred_region
      %63 = dma.done [#allocation6], 320
    $region29: #{tpu_custom_call.1} parent=1 // pred_fallthru
      _
    // Predicated region
    $region30: #{tpu_custom_call.1} parent=1 // pred_check
      _
    $region31: #{tpu_custom_call.1} parent=1 // pred_check_branch
      %65 = sbr.rel (0) target = $region33
    $region32: #{tpu_custom_call.1} parent=1 // pred_region
      %67 = dma.done [#allocation6], 2048
    $region33: #{tpu_custom_call.1} parent=1 // pred_fallthru
      _
    %v69 = vld [vmem:[#allocation2] sm:$0xff]
    %v70 = vld [vmem:[#allocation2 + $0x8] sm:$0xff]
    %v71 = vpack.c.bf16 %v70, %v69
    %v72 = vld [vmem:[#allocation5] sm:$0xf]
    %v73 = vld [vmem:[#allocation5 + $0x4] sm:$0xf]
    %v74 = vld [vmem:[#allocation5 + $0x8] sm:$0xf]
    %v75 = vld [vmem:[#allocation5 + $0xc] sm:$0xf]
    %v76 = vld [vmem:[#allocation5 + $0x10] sm:$0xf]
    %v77 = vld [vmem:[%s2] sm:$0x1]
    %v79 = vperm.slane %v77, 0
    %v86 = vunpack.c.l.b16 %v72
    %v87 = vunpack.c.l.b16 %v73
    %v88 = vunpack.c.l.b16 %v74
    %v89 = vunpack.c.l.b16 %v75
    %v90 = vunpack.c.l.b16 %v76
    %v91 = vpack.c.b16 %v87, %v86
    %v92 = vpack.c.b16 %v89, %v88
    %v93 = vpack.c.b16 %v90, %v90
    %vm96 = vcmask 326656
    %v98 = vsel %vm96, %v71, 0
    %vm100 = vcmask 1043456
    %v102 = vsel %vm100, %v93, 0
    %104 = vmatpush.bf16.msra.mxu0 0
    %105 = vmatpush.bf16.msra.mxu0 0
    %106 = vmatpush.bf16.msra.mxu0 0
    %107 = vmatpush.bf16.msra.mxu0 0
    %108 = vmatpush.bf16.msra.mxu0 0
    %109 = vmatpush.bf16.msra.mxu0 %v102
    %110 = vmatpush.bf16.msra.mxu0 %v92
    %111 = vmatpush.bf16.msra.mxu0 %v91
    %112 = vmatmul.bf16.gmra.mxu0 %v98
    %v113 = vpop.f32.mrf.mxu0
    %v114 = vadd.f32 %v79, %v113
    %v115 = vpop.f32.mrf.mxu0
    %v116 = vadd.f32 %v79, %v115
    %117 = vdwg.mxu0
    %v118 = vmax.f32 %v114, 0.0
    %v119 = vmax.f32 %v116, 0.0
    %v120 = vpack.c.bf16 %v119, %v118
    %v121 = vld [vmem:[#allocation7] sm:$0xff]
    %v122 = vld [vmem:[#allocation7 + $0x8] sm:$0xff]
    %v123 = vld [vmem:[#allocation7 + $0x10] sm:$0xff]
    %v124 = vld [vmem:[#allocation7 + $0x18] sm:$0xff]
    %v125 = vld [vmem:[#allocation7 + $0x20] sm:$0xff]
    %v126 = vld [vmem:[#allocation7 + $0x28] sm:$0xff]
    %v127 = vld [vmem:[#allocation7 + $0x30] sm:$0xff]
    %v128 = vld [vmem:[#allocation7 + $0x38] sm:$0xff]
    %v129 = vld [vmem:[#allocation7 + $0x40] sm:$0xff]
    %v130 = vld [vmem:[#allocation7 + $0x48] sm:$0xff]
    %v131 = vld [vmem:[#allocation7 + $0x50] sm:$0xff]
    %v132 = vld [vmem:[#allocation7 + $0x58] sm:$0xff]
    %v133 = vld [vmem:[#allocation7 + $0x60] sm:$0xff]
    %v134 = vld [vmem:[#allocation7 + $0x68] sm:$0xff]
    %v135 = vld [vmem:[#allocation7 + $0x70] sm:$0xff]
    %v136 = vld [vmem:[#allocation7 + $0x78] sm:$0xff]
    %v137 = vld [vmem:[%s4] sm:$0x3]
    %v139 = vperm.slane %v137, 0
    %v140 = vperm.slane %v137, 1
    %v159 = vunpack.c.l.b16 %v121
    %v160 = vunpack.c.h.b16 %v121
    %v161 = vunpack.c.l.b16 %v122
    %v162 = vunpack.c.h.b16 %v122
    %v163 = vunpack.c.l.b16 %v123
    %v164 = vunpack.c.h.b16 %v123
    %v165 = vunpack.c.l.b16 %v124
    %v166 = vunpack.c.h.b16 %v124
    %v167 = vunpack.c.l.b16 %v125
    %v168 = vunpack.c.h.b16 %v125
    %v169 = vunpack.c.l.b16 %v126
    %v170 = vunpack.c.h.b16 %v126
    %v171 = vunpack.c.l.b16 %v127
    %v172 = vunpack.c.h.b16 %v127
    %v173 = vunpack.c.l.b16 %v128
    %v174 = vunpack.c.h.b16 %v128
    %v175 = vunpack.c.l.b16 %v129
    %v176 = vunpack.c.h.b16 %v129
    %v177 = vunpack.c.l.b16 %v130
    %v178 = vunpack.c.h.b16 %v130
    %v179 = vunpack.c.l.b16 %v131
    %v180 = vunpack.c.h.b16 %v131
    %v181 = vunpack.c.l.b16 %v132
    %v182 = vunpack.c.h.b16 %v132
    %v183 = vunpack.c.l.b16 %v133
    %v184 = vunpack.c.h.b16 %v133
    %v185 = vunpack.c.l.b16 %v134
    %v186 = vunpack.c.h.b16 %v134
    %v187 = vunpack.c.l.b16 %v135
    %v188 = vunpack.c.h.b16 %v135
    %v189 = vunpack.c.l.b16 %v136
    %v190 = vunpack.c.h.b16 %v136
    %v191 = vpack.c.b16 %v161, %v159
    %v192 = vpack.c.b16 %v162, %v160
    %v193 = vpack.c.b16 %v165, %v163
    %v194 = vpack.c.b16 %v166, %v164
    %v195 = vpack.c.b16 %v169, %v167
    %v196 = vpack.c.b16 %v170, %v168
    %v197 = vpack.c.b16 %v173, %v171
    %v198 = vpack.c.b16 %v174, %v172
    %v199 = vpack.c.b16 %v177, %v175
    %v200 = vpack.c.b16 %v178, %v176
    %v201 = vpack.c.b16 %v181, %v179
    %v202 = vpack.c.b16 %v182, %v180
    %v203 = vpack.c.b16 %v185, %v183
    %v204 = vpack.c.b16 %v186, %v184
    %v205 = vpack.c.b16 %v189, %v187
    %v206 = vpack.c.b16 %v190, %v188
    %223 = vmatpush.bf16.msra.mxu0 %v205
    %224 = vmatpush.bf16.msra.mxu0 %v203
    %225 = vmatpush.bf16.msra.mxu0 %v201
    %226 = vmatpush.bf16.msra.mxu0 %v199
    %227 = vmatpush.bf16.msra.mxu0 %v197
    %228 = vmatpush.bf16.msra.mxu0 %v195
    %229 = vmatpush.bf16.msra.mxu0 %v193
    %230 = vmatpush.bf16.msra.mxu0 %v191
    %231 = vmatmul.bf16.gmra.mxu0 %v120
    %v232 = vpop.f32.mrf.mxu0
    %v233 = vadd.f32 %v139, %v232
    %v234 = vpop.f32.mrf.mxu0
    %v235 = vadd.f32 %v139, %v234
    %236 = vdwg.mxu0
    %237 = vmatpush.bf16.msra.mxu0 %v206
    %238 = vmatpush.bf16.msra.mxu0 %v204
    %239 = vmatpush.bf16.msra.mxu0 %v202
    %240 = vmatpush.bf16.msra.mxu0 %v200
    %241 = vmatpush.bf16.msra.mxu0 %v198
    %242 = vmatpush.bf16.msra.mxu0 %v196
    %243 = vmatpush.bf16.msra.mxu0 %v194
    %244 = vmatpush.bf16.msra.mxu0 %v192
    %245 = vmatmul.bf16.gmra.mxu0 %v120
    %v246 = vpop.f32.mrf.mxu0
    %v247 = vadd.f32 %v140, %v246
    %v248 = vpop.f32.mrf.mxu0
    %v249 = vadd.f32 %v140, %v248
    %250 = vdwg.mxu0
    %251 = vst [vmem:[#allocation8] sm:$0xff] %v233
    %252 = vst [vmem:[#allocation8 + $0x8] sm:$0xff] %v247
    %253 = vst [vmem:[#allocation8 + $0x10] sm:$0xff] %v235
    %254 = vst [vmem:[#allocation8 + $0x18] sm:$0xff] %v249
    // Predicated region
    $region34: #{tpu_custom_call.1} parent=1 // pred_check
      _
    $region35: #{tpu_custom_call.1} parent=1 // pred_check_branch
      %256 = sbr.rel (0) target = $region37
    $region36: #{tpu_custom_call.1} parent=1 // pred_region
      %258 = vsyncadd [#allocation4], 0
      %s259 = sshll.u32 [#allocation8], 4
      %s260 = int_to_ptr.vmem [resolvable:$true] %s259
      %s261 = sshll.u32 %s5, 4
      %s262 = int_to_ptr.hbm [resolvable:$true] %s261
      %267 = dma.vmem_to_hbm [thread:$0]  %s260, 512, %s262, [#allocation4], 256, 256, 16
    $region37: #{tpu_custom_call.1} parent=1 // pred_fallthru
      _
    // Predicated region
    $region38: #{tpu_custom_call.1} parent=1 // pred_check
      _
    $region39: #{tpu_custom_call.1} parent=1 // pred_check_branch
      %269 = sbr.rel (0) target = $region41
    $region40: #{tpu_custom_call.1} parent=1 // pred_region
      %271 = dma.done [#allocation4], 512
    $region41: #{tpu_custom_call.1} parent=1 // pred_fallthru
      _
    %272 = vsyncpa [#allocation3], 1
    %273 = vsyncpa [#allocation6], 1
    %274 = vsyncpa [#allocation4], 1

</llo_original>
